<compile_context>
chip_gen: v7x
topology: tpu7x:2x2x1
jax: 0.10.0
libtpu: 0.0.40
codegen_flags: <defaults>
</compile_context>

<pallas_src>
import functools

import jax
import jax.numpy as jnp
from jax.experimental import pallas as pl
from jax.experimental.pallas import tpu as pltpu

_LANE = 128          # lane width
_BLOCK_ROWS = 2048   # rows per tile -> 2048*128*4B = 1 MiB per f32 input tile
_NCORES = 2          # leading "parallel" axis (2 TCs on v7x; harmless elsewhere)


def _dice_partial_kernel(x_ref, t_ref, o_ref, *, rows_per_core, block_rows,
                         need_mask):
    """Accumulates [sum(x*t), sum(x), sum(t)] as (1, 128) lane vectors."""
    i = pl.program_id(1)

    @pl.when(i == 0)
    def _():
        o_ref[...] = jnp.zeros_like(o_ref)

    x = x_ref[0].astype(jnp.float32)   # (block_rows, _LANE)
    t = t_ref[0].astype(jnp.float32)

    if need_mask:
        # Only the last block along the reduction axis is ragged; rows past the
        # end of this core's slab contain unspecified data and must be zeroed.
        valid_rows = rows_per_core - i * block_rows
        row_id = jax.lax.broadcasted_iota(jnp.int32, (block_rows, _LANE), 0)
        keep = row_id < valid_rows
        x = jnp.where(keep, x, 0.0)
        t = jnp.where(keep, t, 0.0)

    xt = x * t
    # Sublane-axis reductions: pure vector adds (plus one tiny intra-vreg fold),
    # accumulated directly into the resident output block.
    o_ref[0, 0] += jnp.sum(xt, axis=0, keepdims=True)
    o_ref[0, 1] += jnp.sum(x, axis=0, keepdims=True)
    o_ref[0, 2] += jnp.sum(t, axis=0, keepdims=True)


def _jax_partial_sums(x, t):
    xf = x.astype(jnp.float32)
    tf = t.astype(jnp.float32)
    return jnp.stack([jnp.sum(xf * tf), jnp.sum(xf), jnp.sum(tf)])


def dice_loss(inputs, targets, smooth=1.0):
    """Pallas equivalent of DiceLoss.forward(inputs, targets, smooth)."""
    x = inputs.reshape(-1)   # free reshape, native dtype (no wrapper cast/pad)
    t = targets.reshape(-1)
    n = x.shape[0]

    rows = n // _LANE
    rem = n - rows * _LANE

    if rows == 0:
        # Tiny input: not worth a kernel launch.
        sums = _jax_partial_sums(x, t)
    else:
        ncores = _NCORES if rows % _NCORES == 0 else 1
        rows_per_core = rows // ncores
        n_main = ncores * rows_per_core * _LANE
        if rem:
            # TODO(synk): a ragged tail (numel % 128 != 0) forces a slice copy of
            # the main part; typical NCHW inputs (numel % 128 == 0) avoid it.
            x_main = x[:n_main]
            t_main = t[:n_main]
        else:
            x_main, t_main = x, t

        x3 = x_main.reshape(ncores, rows_per_core, _LANE)
        t3 = t_main.reshape(ncores, rows_per_core, _LANE)

        block_rows = min(_BLOCK_ROWS, rows_per_core)
        need_mask = (rows_per_core % block_rows) != 0
        grid = (ncores, pl.cdiv(rows_per_core, block_rows))

        kernel = functools.partial(
            _dice_partial_kernel,
            rows_per_core=rows_per_core,
            block_rows=block_rows,
            need_mask=need_mask,
        )

        out = pl.pallas_call(
            kernel,
            out_shape=jax.ShapeDtypeStruct((ncores, 3, 1, _LANE), jnp.float32),
            grid_spec=pltpu.PrefetchScalarGridSpec(
                num_scalar_prefetch=0,
                grid=grid,
                in_specs=[
                    pl.BlockSpec((1, block_rows, _LANE), lambda c, i: (c, i, 0)),
                    pl.BlockSpec((1, block_rows, _LANE), lambda c, i: (c, i, 0)),
                ],
                out_specs=pl.BlockSpec((1, 3, 1, _LANE),
                                       lambda c, i: (c, 0, 0, 0)),
            ),
            compiler_params=pltpu.CompilerParams(
                dimension_semantics=("parallel", "arbitrary"),
            ),
        )(x3, t3)

        sums = jnp.sum(out, axis=(0, 2, 3))   # (3,) = [sum(x*t), sum(x), sum(t)]
        if rem:
            sums = sums + _jax_partial_sums(x[n_main:], t[n_main:])

    intersection = sums[0]
    denom = sums[1] + sums[2] + smooth
    dice = (2.0 * intersection + smooth) / denom
    return 1.0 - dice


if __name__ == "__main__":
    key = jax.random.PRNGKey(0)
    k1, k2 = jax.random.split(key)
    # Typical segmentation shapes: (batch=2, channels=4, H=16, W=16)
    inputs = jax.nn.sigmoid(jax.random.normal(k1, (2, 4, 16, 16), dtype=jnp.float32))
    targets = (jax.random.uniform(k2, (2, 4, 16, 16)) > 0.5).astype(jnp.float32)

    loss = dice_loss(inputs, targets, smooth=1.0)
    jax.block_until_ready(loss)

    # Pure-JAX reference of the same math.
    xf = inputs.reshape(-1)
    tf = targets.reshape(-1)
    inter = jnp.sum(xf * tf)
    ref = 1.0 - (2.0 * inter + 1.0) / (jnp.sum(xf) + jnp.sum(tf) + 1.0)
    assert jnp.allclose(loss, ref, atol=1e-5, rtol=1e-5), (loss, ref)

    print("KERNEL_OK")
</pallas_src>

<mosaic_0001>
module attributes {stable_mosaic.version = 11 : i64} {
  func.func @_dice_partial_kernel(%arg0: i32, %arg1: i32, %arg2: memref<1x8x128xf32, #tpu.memory_space<vmem>>, %arg3: memref<1x8x128xf32, #tpu.memory_space<vmem>>, %arg4: memref<1x3x1x128xf32, #tpu.memory_space<vmem>>) attributes {dimension_semantics = [#tpu.dimension_semantics<parallel>, #tpu.dimension_semantics<arbitrary>], iteration_bounds = array<i64: 2, 1>, scalar_prefetch = 0 : i64, scratch_operands = 0 : i64, tpu.core_type = #tpu.core_type<tc>, window_params = [{transform_indices = @transform_0, window_bounds = array<i64: 1, 8, 128>}, {transform_indices = @transform_1, window_bounds = array<i64: 1, 8, 128>}, {transform_indices = @transform_2, window_bounds = array<i64: 1, 3, 1, 128>}]} {
    %c0_i32 = arith.constant 0 : i32
    %0 = arith.cmpi eq, %arg1, %c0_i32 : i32
    %1 = arith.extui %0 : i1 to i32
    %c0_i32_0 = arith.constant 0 : i32
    %2 = arith.cmpi ne, %1, %c0_i32_0 : i32
    scf.if %2 {
      %cst_30 = arith.constant 0.000000e+00 : f32
      %32 = vector.broadcast %cst_30 : f32 to vector<1x3x1x128xf32>
      %c0_31 = arith.constant 0 : index
      %c0_32 = arith.constant 0 : index
      %c0_33 = arith.constant 0 : index
      %c0_34 = arith.constant 0 : index
      %33 = vector.load %arg4[%c0_31, %c0_32, %c0_33, %c0_34] : memref<1x3x1x128xf32, #tpu.memory_space<vmem>>, vector<1x3x1x128xf32>
      tpu.vector_store %arg4[%c0_31, %c0_32, %c0_33, %c0_34], %32 {strides = array<i32>} : memref<1x3x1x128xf32, #tpu.memory_space<vmem>>, vector<1x3x1x128xf32>,
    } else {
    }
    %c0 = arith.constant 0 : index
    %c0_1 = arith.constant 0 : index
    %c0_2 = arith.constant 0 : index
    %3 = vector.load %arg2[%c0, %c0_1, %c0_2] : memref<1x8x128xf32, #tpu.memory_space<vmem>>, vector<1x8x128xf32>
    %4 = vector.shape_cast %3 : vector<1x8x128xf32> to vector<8x128xf32>
    %c0_3 = arith.constant 0 : index
    %c0_4 = arith.constant 0 : index
    %c0_5 = arith.constant 0 : index
    %5 = vector.load %arg3[%c0_3, %c0_4, %c0_5] : memref<1x8x128xf32, #tpu.memory_space<vmem>>, vector<1x8x128xf32>
    %6 = vector.shape_cast %5 : vector<1x8x128xf32> to vector<8x128xf32>
    %7 = arith.mulf %4, %6 : vector<8x128xf32>
    %c0_6 = arith.constant 0 : index
    %c0_7 = arith.constant 0 : index
    %c0_8 = arith.constant 0 : index
    %c0_9 = arith.constant 0 : index
    %8 = vector.load %arg4[%c0_6, %c0_7, %c0_8, %c0_9] : memref<1x3x1x128xf32, #tpu.memory_space<vmem>>, vector<1x1x1x128xf32>
    %9 = vector.shape_cast %8 : vector<1x1x1x128xf32> to vector<1x128xf32>
    %cst = arith.constant dense<0.000000e+00> : vector<128xf32>
    %10 = vector.multi_reduction <add>, %7, %cst [0] : vector<8x128xf32> to vector<128xf32>
    %11 = vector.shape_cast %10 : vector<128xf32> to vector<1x128xf32>
    %12 = arith.addf %9, %11 : vector<1x128xf32>
    %c0_10 = arith.constant 0 : index
    %c0_11 = arith.constant 0 : index
    %c0_12 = arith.constant 0 : index
    %c0_13 = arith.constant 0 : index
    %13 = vector.load %arg4[%c0_10, %c0_11, %c0_12, %c0_13] : memref<1x3x1x128xf32, #tpu.memory_space<vmem>>, vector<1x1x1x128xf32>
    %14 = vector.shape_cast %13 : vector<1x1x1x128xf32> to vector<1x128xf32>
    %15 = vector.shape_cast %12 : vector<1x128xf32> to vector<1x1x1x128xf32>
    tpu.vector_store %arg4[%c0_10, %c0_11, %c0_12, %c0_13], %15 {strides = array<i32>} : memref<1x3x1x128xf32, #tpu.memory_space<vmem>>, vector<1x1x1x128xf32>,
    %c0_14 = arith.constant 0 : index
    %c1 = arith.constant 1 : index
    %c0_15 = arith.constant 0 : index
    %c0_16 = arith.constant 0 : index
    %16 = vector.load %arg4[%c0_14, %c1, %c0_15, %c0_16] : memref<1x3x1x128xf32, #tpu.memory_space<vmem>>, vector<1x1x1x128xf32>
    %17 = vector.shape_cast %16 : vector<1x1x1x128xf32> to vector<1x128xf32>
    %cst_17 = arith.constant dense<0.000000e+00> : vector<128xf32>
    %18 = vector.multi_reduction <add>, %4, %cst_17 [0] : vector<8x128xf32> to vector<128xf32>
    %19 = vector.shape_cast %18 : vector<128xf32> to vector<1x128xf32>
    %20 = arith.addf %17, %19 : vector<1x128xf32>
    %c0_18 = arith.constant 0 : index
    %c1_19 = arith.constant 1 : index
    %c0_20 = arith.constant 0 : index
    %c0_21 = arith.constant 0 : index
    %21 = vector.load %arg4[%c0_18, %c1_19, %c0_20, %c0_21] : memref<1x3x1x128xf32, #tpu.memory_space<vmem>>, vector<1x1x1x128xf32>
    %22 = vector.shape_cast %21 : vector<1x1x1x128xf32> to vector<1x128xf32>
    %23 = vector.shape_cast %20 : vector<1x128xf32> to vector<1x1x1x128xf32>
    tpu.vector_store %arg4[%c0_18, %c1_19, %c0_20, %c0_21], %23 {strides = array<i32>} : memref<1x3x1x128xf32, #tpu.memory_space<vmem>>, vector<1x1x1x128xf32>,
    %c0_22 = arith.constant 0 : index
    %c2 = arith.constant 2 : index
    %c0_23 = arith.constant 0 : index
    %c0_24 = arith.constant 0 : index
    %24 = vector.load %arg4[%c0_22, %c2, %c0_23, %c0_24] : memref<1x3x1x128xf32, #tpu.memory_space<vmem>>, vector<1x1x1x128xf32>
    %25 = vector.shape_cast %24 : vector<1x1x1x128xf32> to vector<1x128xf32>
    %cst_25 = arith.constant dense<0.000000e+00> : vector<128xf32>
    %26 = vector.multi_reduction <add>, %6, %cst_25 [0] : vector<8x128xf32> to vector<128xf32>
    %27 = vector.shape_cast %26 : vector<128xf32> to vector<1x128xf32>
    %28 = arith.addf %25, %27 : vector<1x128xf32>
    %c0_26 = arith.constant 0 : index
    %c2_27 = arith.constant 2 : index
    %c0_28 = arith.constant 0 : index
    %c0_29 = arith.constant 0 : index
    %29 = vector.load %arg4[%c0_26, %c2_27, %c0_28, %c0_29] : memref<1x3x1x128xf32, #tpu.memory_space<vmem>>, vector<1x1x1x128xf32>
    %30 = vector.shape_cast %29 : vector<1x1x1x128xf32> to vector<1x128xf32>
    %31 = vector.shape_cast %28 : vector<1x128xf32> to vector<1x1x1x128xf32>
    tpu.vector_store %arg4[%c0_26, %c2_27, %c0_28, %c0_29], %31 {strides = array<i32>} : memref<1x3x1x128xf32, #tpu.memory_space<vmem>>, vector<1x1x1x128xf32>,
    return
  }
  func.func @transform_0(%arg0: i32, %arg1: i32) -> (i32, i32, i32) {
    %c0_i32 = arith.constant 0 : i32
    %c0_i32_0 = arith.constant 0 : i32
    return %arg0, %arg1, %c0_i32 : i32, i32, i32
  }
  func.func @transform_1(%arg0: i32, %arg1: i32) -> (i32, i32, i32) {
    %c0_i32 = arith.constant 0 : i32
    %c0_i32_0 = arith.constant 0 : i32
    return %arg0, %arg1, %c0_i32 : i32, i32, i32
  }
  func.func @transform_2(%arg0: i32, %arg1: i32) -> (i32, i32, i32, i32) {
    %c0_i32 = arith.constant 0 : i32
    %c0_i32_0 = arith.constant 0 : i32
    %c0_i32_1 = arith.constant 0 : i32
    %c0_i32_2 = arith.constant 0 : i32
    return %arg0, %c0_i32, %c0_i32_0, %c0_i32_1 : i32, i32, i32, i32
  }
}

</mosaic_0001>

<llo_original>
// kernel: tpu_custom_call.1
$region0: #{tpu_custom_call.1}
  #allocation0 [shape = 'u32[]', space=smem, size = 0x4, offset = 0x4, fixed_abs, tag = 'smem constant byte address 0x4 - core index']
  #allocation1 [shape = 'u32[144,128]{1,0:T(1,128)}', space=vmem, size = 0x12000, scoped, tag = 'internal scratch']
  %s0 = inlined_call_operand.hbm [shape: f32[2,8,128], index: 0, kind: input, shape index: {}]
  %s1 = inlined_call_operand.hbm [shape: f32[2,8,128], index: 1, kind: input, shape index: {}]
  %s2 = inlined_call_operand.hbm [shape: f32[2,3,1,128], index: 2, kind: output, shape index: {}]
  %s3 = sld [smem:[#allocation0]]
  $region53: #{tpu_custom_call.1} parent=0
    _
  %s5 = ssub.s32 1, %s3
  %s6 = scalar_select 0, %s5, %s3
  $region1: #{tpu_custom_call.1} parent=0
    #allocation2 [shape = 'u8[8192]{0}', space=vmem, size = 0x2000, scoped, tag = 'input window, operand 0']
    #allocation3 [shape = 's32[2]{0}', space=sflag, size = 0x8, scoped, tag = 'scoped memory for tpu_custom_call.1']
    #allocation4 [shape = 's32[2]{0}', space=sflag, size = 0x8, scoped, tag = 'scoped memory for tpu_custom_call.1']
    #allocation5 [shape = 'u8[8192]{0}', space=vmem, size = 0x2000, scoped, tag = 'input window, operand 1']
    #allocation6 [shape = 's32[2]{0}', space=sflag, size = 0x8, scoped, tag = 'scoped memory for tpu_custom_call.1']
    #allocation7 [shape = 'u8[3072]{0}', space=vmem, size = 0xc00, scoped, tag = 'output window, operand 0']
    %7 = vsyncpa [#allocation3], 0
    %s8 = scalar_lea.sflag [#allocation3], 1
    %9 = vsyncpa %s8, 0
    %10 = vsyncpa [#allocation6], 0
    %s11 = scalar_lea.sflag [#allocation6], 1
    %12 = vsyncpa %s11, 0
    %13 = vsyncpa [#allocation4], 0
    %s14 = scalar_lea.sflag [#allocation4], 1
    %15 = vsyncpa %s14, 0
    loop: start=0, step=1, limit=4
    $region2: #{tpu_custom_call.1} parent=1 // loop_pre_header
      _
    $region3: #{tpu_custom_call.1} parent=1 // loop_header
      %s17 = sphi 0, %s21
      %p18 = scmp.ge.s32.totalorder %s17, 4
      %s24 = sphi 0, %s36
      %s25 = sphi 0, %s32
      %s26 = sphi 0, %s24
      %s27 = sphi 0, %s25
      %s28 = sphi 0, %s26
      %s29 = sphi 0, %s27
      %s41 = sphi 0, %s43
      %s44 = sphi 0, %s41
      %s45 = sphi 0, %s44
      %s61 = sphi 0, %s45
      %s69 = sphi 0, %s71
      %s72 = sphi 0, %s69
      %s73 = sphi 0, %s72
      %s89 = sphi 0, %s73
      %s95 = sphi 0, %s97
      %s98 = sphi 0, %s95
      %s99 = sphi 0, %s98
      %s115 = sphi 0, %s99
    $region4: #{tpu_custom_call.1} parent=1 // loop_header_branch
      %20 = sbr.rel (%p18) target = $region8
    $region5: #{tpu_custom_call.1} parent=1 // loop_body
      %s22 = ssub.s32 %s17, 1
      %s23 = ssub.s32 %s17, 2
      %s30 = sadd.s32 1, %s25
      %p31 = scmp.ge.s32.totalorder %s30, 1
      %s32 = scalar_select %p31, 0, %s30
      %s33 = sadd.s32 1, %s24
      %s34 = scalar_select %p31, %s33, %s24
      %p35 = scmp.ge.s32.totalorder %s34, 2
      %s36 = scalar_select %p35, 0, %s34
      %s37 = ssub.s32 %s24, %s36
      %s38 = ssub.s32 %s25, %s32
      %s39 = sor.u32 %s37, %s38
      %p40 = scmp.eq.s32.totalorder %s39, 0
      %s42 = sadd.s32 %s41, 1
      %s43 = scalar_select %p40, %s41, %s42
      %p46 = pneg %p40
      %p47 = scmp.eq.s32.totalorder %s17, 1
      %p48 = por %p46, %p47
      %p49 = scmp.ne.s32.totalorder %s41, %s44
      %p50 = scmp.eq.s32.totalorder %s17, 0
      %p51 = por %p49, %p50
      %p52 = scmp.ne.s32.totalorder %s41, %s44
      %p53 = scmp.eq.s32.totalorder %s22, 1
      %p54 = por %p52, %p53
      %p55 = scmp.ne.s32.totalorder %s44, %s45
      %p56 = scmp.eq.s32.totalorder %s22, 0
      %p57 = por %p55, %p56
      %p58 = scmp.ne.s32.totalorder %s44, %s45
      %p59 = scmp.eq.s32.totalorder %s23, 1
      %p60 = por %p58, %p59
      %p62 = scmp.ne.s32.totalorder %s45, %s61
      %p63 = scmp.eq.s32.totalorder %s23, 0
      %p64 = por %p62, %p63
      %s65 = ssub.s32 %s24, %s36
      %s66 = ssub.s32 %s25, %s32
      %s67 = sor.u32 %s65, %s66
      %p68 = scmp.eq.s32.totalorder %s67, 0
      %s70 = sadd.s32 %s69, 1
      %s71 = scalar_select %p68, %s69, %s70
      %p74 = pneg %p68
      %p75 = scmp.eq.s32.totalorder %s17, 1
      %p76 = por %p74, %p75
      %p77 = scmp.ne.s32.totalorder %s69, %s72
      %p78 = scmp.eq.s32.totalorder %s17, 0
      %p79 = por %p77, %p78
      %p80 = scmp.ne.s32.totalorder %s69, %s72
      %p81 = scmp.eq.s32.totalorder %s22, 1
      %p82 = por %p80, %p81
      %p83 = scmp.ne.s32.totalorder %s72, %s73
      %p84 = scmp.eq.s32.totalorder %s22, 0
      %p85 = por %p83, %p84
      %p86 = scmp.ne.s32.totalorder %s72, %s73
      %p87 = scmp.eq.s32.totalorder %s23, 1
      %p88 = por %p86, %p87
      %p90 = scmp.ne.s32.totalorder %s73, %s89
      %p91 = scmp.eq.s32.totalorder %s23, 0
      %p92 = por %p90, %p91
      %s93 = ssub.s32 %s24, %s36
      %p94 = scmp.eq.s32.totalorder %s93, 0
      %s96 = sadd.s32 %s95, 1
      %s97 = scalar_select %p94, %s95, %s96
      %p100 = pneg %p94
      %p101 = scmp.eq.s32.totalorder %s17, 1
      %p102 = por %p100, %p101
      %p103 = scmp.ne.s32.totalorder %s95, %s98
      %p104 = scmp.eq.s32.totalorder %s17, 0
      %p105 = por %p103, %p104
      %p106 = scmp.ne.s32.totalorder %s95, %s98
      %p107 = scmp.eq.s32.totalorder %s22, 1
      %p108 = por %p106, %p107
      %p109 = scmp.ne.s32.totalorder %s98, %s99
      %p110 = scmp.eq.s32.totalorder %s22, 0
      %p111 = por %p109, %p110
      %p112 = scmp.ne.s32.totalorder %s98, %s99
      %p113 = scmp.eq.s32.totalorder %s23, 1
      %p114 = por %p112, %p113
      %p116 = scmp.ne.s32.totalorder %s99, %s115
      %p117 = scmp.eq.s32.totalorder %s23, 0
      %p118 = por %p116, %p117
      %p119 = scmp.le.s32.totalorder 1, %s17
      %p120 = scmp.lt.s32.totalorder %s17, 3
      %p121 = pnand %p119, %p120
      %p122 = pneg %p121
      // Predicated region
      $region9: #{tpu_custom_call.1} parent=5 // pred_check
        _
      $region10: #{tpu_custom_call.1} parent=5 // pred_check_branch
        %124 = sbr.rel (%p121) target = $region12
      $region11: #{tpu_custom_call.1} parent=5 // pred_region
        %s125 = ssub.s32 %s17, 1
      $region12: #{tpu_custom_call.1} parent=5 // pred_fallthru
        _
      %p126 = scmp.lt.s32.totalorder %s17, 2
      // Predicated region
      $region13: #{tpu_custom_call.1} parent=5 // pred_check
        %p127 = pneg %p126
      $region14: #{tpu_custom_call.1} parent=5 // pred_check_branch
        %129 = sbr.rel (%p127) target = $region16
      $region15: #{tpu_custom_call.1} parent=5 // pred_region
        // Predicated region
        $region17: #{tpu_custom_call.1} parent=15 // pred_check
          %p130 = pneg %p51
        $region18: #{tpu_custom_call.1} parent=15 // pred_check_branch
          %132 = sbr.rel (%p130) target = $region20
        $region19: #{tpu_custom_call.1} parent=15 // pred_region
          %s133 = sand.u32 %s41, 1
          %s134 = scalar_lea.sflag [#allocation3], %s133
          %s135 = sand.u32 %s41, 1
          %s136 = smul.addr %s135, 8
          %s137 = scalar_lea.vmem [#allocation2], %s136
          %s139 = ssub.s32 128, 128
          %140 = vsyncadd %s134, %s139
          %s141 = sadd.s32 %s25, %s24
          %s142 = smul.addr %s141, 128
          %s143 = scalar_lea.hbm %s0, %s142
          %s145 = sshll.u32 %s137, 4
          %s146 = int_to_ptr.vmem [resolvable:$true] %s145
          %148 = dma.hbm_to_vmem [thread:$0]  %s143, 128, %s146, %s134
        $region20: #{tpu_custom_call.1} parent=15 // pred_fallthru
          _
        // Predicated region
        $region21: #{tpu_custom_call.1} parent=15 // pred_check
          %p149 = pneg %p79
        $region22: #{tpu_custom_call.1} parent=15 // pred_check_branch
          %151 = sbr.rel (%p149) target = $region24
        $region23: #{tpu_custom_call.1} parent=15 // pred_region
          %s152 = sand.u32 %s69, 1
          %s153 = scalar_lea.sflag [#allocation6], %s152
          %s154 = sand.u32 %s69, 1
          %s155 = smul.addr %s154, 8
          %s156 = scalar_lea.vmem [#allocation5], %s155
          %s158 = ssub.s32 128, 128
          %159 = vsyncadd %s153, %s158
          %s160 = sadd.s32 %s25, %s24
          %s161 = smul.addr %s160, 128
          %s162 = scalar_lea.hbm %s1, %s161
          %s164 = sshll.u32 %s156, 4
          %s165 = int_to_ptr.vmem [resolvable:$true] %s164
          %167 = dma.hbm_to_vmem [thread:$0]  %s162, 128, %s165, %s153
        $region24: #{tpu_custom_call.1} parent=15 // pred_fallthru
          _
      $region16: #{tpu_custom_call.1} parent=5 // pred_fallthru
        _
      %p168 = scmp.le.s32.totalorder 1, %s17
      %p169 = scmp.lt.s32.totalorder %s17, 3
      %p170 = pnand %p168, %p169
      %p171 = pneg %p170
      // Predicated region
      $region25: #{tpu_custom_call.1} parent=5 // pred_check
        _
      $region26: #{tpu_custom_call.1} parent=5 // pred_check_branch
        %173 = sbr.rel (%p170) target = $region28
      $region27: #{tpu_custom_call.1} parent=5 // pred_region
        %s174 = ssub.s32 %s17, 1
        %s175 = sand.u32 %s44, 1
        %s176 = scalar_lea.sflag [#allocation3], %s175
        %s177 = sand.u32 %s44, 1
        %s178 = smul.addr %s177, 8
        %s179 = scalar_lea.vmem [#allocation2], %s178
        // Predicated region
        $region29: #{tpu_custom_call.1} parent=27 // pred_check
          %p180 = pneg %p57
        $region30: #{tpu_custom_call.1} parent=27 // pred_check_branch
          %182 = sbr.rel (%p180) target = $region32
        $region31: #{tpu_custom_call.1} parent=27 // pred_region
          %183 = dma.done %s176, 128
        $region32: #{tpu_custom_call.1} parent=27 // pred_fallthru
          _
        %s184 = sand.u32 %s72, 1
        %s185 = scalar_lea.sflag [#allocation6], %s184
        %s186 = sand.u32 %s72, 1
        %s187 = smul.addr %s186, 8
        %s188 = scalar_lea.vmem [#allocation5], %s187
        // Predicated region
        $region33: #{tpu_custom_call.1} parent=27 // pred_check
          %p189 = pneg %p85
        $region34: #{tpu_custom_call.1} parent=27 // pred_check_branch
          %191 = sbr.rel (%p189) target = $region36
        $region35: #{tpu_custom_call.1} parent=27 // pred_region
          %192 = dma.done %s185, 128
        $region36: #{tpu_custom_call.1} parent=27 // pred_fallthru
          _
        %s193 = sand.u32 %s44, 1
        %s194 = scalar_lea.sflag [#allocation3], %s193
        %s195 = sand.u32 %s44, 1
        %s196 = smul.addr %s195, 8
        %s197 = scalar_lea.vmem [#allocation2], %s196
        %p198 = pneg %p57
        %p199 = pneg %p54
        %s200 = sand.u32 %s72, 1
        %s201 = scalar_lea.sflag [#allocation6], %s200
        %s202 = sand.u32 %s72, 1
        %s203 = smul.addr %s202, 8
        %s204 = scalar_lea.vmem [#allocation5], %s203
        %p205 = pneg %p85
        %p206 = pneg %p82
        %p207 = pneg %p111
        %p208 = pneg %p108
        %s209 = sand.u32 %s98, 1
        %s210 = scalar_lea.sflag [#allocation4], %s209
        %s211 = sand.u32 %s98, 1
        %s212 = smul.addr %s211, 3
        %s213 = scalar_lea.vmem [#allocation7], %s212
        %p214 = scmp.eq.s32.totalorder %s27, 0
        // Predicated region
        $region37: #{tpu_custom_call.1} parent=27 // pred_check
          %p215 = pneg %p214
        $region38: #{tpu_custom_call.1} parent=27 // pred_check_branch
          %217 = sbr.rel (%p215) target = $region40
        $region39: #{tpu_custom_call.1} parent=27 // pred_region
          %218 = vst [vmem:[%s213] sm:$0x1] 0.0
          %219 = vst [vmem:[%s213 + $0x1] sm:$0x1] 0.0
          %220 = vst [vmem:[%s213 + $0x2] sm:$0x1] 0.0
        $region40: #{tpu_custom_call.1} parent=27 // pred_fallthru
          _
        %v221 = vld [vmem:[%s179] sm:$0xff]
        %v222 = vld [vmem:[%s188] sm:$0xff]
        %v223 = vmul.f32 %v221, %v222
        %v224 = vld [vmem:[%s213] sm:$0x1]
        %v225 = vrot.slane %v223, 4
        %v226 = vadd.f32 %v223, %v225
        %v227 = vrot.slane %v226, 2
        %v228 = vadd.f32 %v226, %v227
        %v229 = vrot.slane %v228, 1
        %v230 = vadd.f32 %v228, %v229
        %v231 = vadd.f32 %v224, %v230
        %232 = vst [vmem:[%s213] sm:$0x1] %v231
        %s233 = scalar_lea.vmem %s213, 1 [#allocation7]
        %v234 = vld [vmem:[%s233] sm:$0x1]
        %v235 = vrot.slane %v221, 4
        %v236 = vadd.f32 %v221, %v235
        %v237 = vrot.slane %v236, 2
        %v238 = vadd.f32 %v236, %v237
        %v239 = vrot.slane %v238, 1
        %v240 = vadd.f32 %v238, %v239
        %v241 = vadd.f32 %v234, %v240
        %242 = vst [vmem:[%s233] sm:$0x1] %v241
        %s243 = scalar_lea.vmem %s213, 2 [#allocation7]
        %v244 = vld [vmem:[%s243] sm:$0x1]
        %v245 = vrot.slane %v222, 4
        %v246 = vadd.f32 %v222, %v245
        %v247 = vrot.slane %v246, 2
        %v248 = vadd.f32 %v246, %v247
        %v249 = vrot.slane %v248, 1
        %v250 = vadd.f32 %v248, %v249
        %v251 = vadd.f32 %v244, %v250
        %252 = vst [vmem:[%s243] sm:$0x1] %v251
        %s253 = sand.u32 %s98, 1
        %s254 = scalar_lea.sflag [#allocation4], %s253
        %s255 = sand.u32 %s98, 1
        %s256 = smul.addr %s255, 3
        %s257 = scalar_lea.vmem [#allocation7], %s256
        // Predicated region
        $region41: #{tpu_custom_call.1} parent=27 // pred_check
          %p258 = pneg %p108
        $region42: #{tpu_custom_call.1} parent=27 // pred_check_branch
          %260 = sbr.rel (%p258) target = $region44
        $region43: #{tpu_custom_call.1} parent=27 // pred_region
          %s262 = ssub.s32 48, 48
          %263 = vsyncadd %s254, %s262
          %s264 = smul.addr %s26, 3
          %s265 = smul.addr %s264, 16
          %s266 = scalar_lea.hbm %s2, %s265
          %s267 = sshll.u32 %s257, 4
          %s268 = int_to_ptr.vmem [resolvable:$true] %s267
          %273 = dma.vmem_to_hbm [thread:$0]  %s268, 48, %s266, %s254, 16, 16, 1
        $region44: #{tpu_custom_call.1} parent=27 // pred_fallthru
          _
      $region28: #{tpu_custom_call.1} parent=5 // pred_fallthru
        _
      %p274 = scmp.le.s32.totalorder 2, %s17
      // Predicated region
      $region45: #{tpu_custom_call.1} parent=5 // pred_check
        %p275 = pneg %p274
      $region46: #{tpu_custom_call.1} parent=5 // pred_check_branch
        %277 = sbr.rel (%p275) target = $region48
      $region47: #{tpu_custom_call.1} parent=5 // pred_region
        %s278 = ssub.s32 %s17, 2
        // Predicated region
        $region49: #{tpu_custom_call.1} parent=47 // pred_check
          %p279 = pneg %p114
        $region50: #{tpu_custom_call.1} parent=47 // pred_check_branch
          %281 = sbr.rel (%p279) target = $region52
        $region51: #{tpu_custom_call.1} parent=47 // pred_region
          %s282 = sand.u32 %s99, 1
          %s283 = scalar_lea.sflag [#allocation4], %s282
          %s284 = sand.u32 %s99, 1
          %s285 = smul.addr %s284, 3
          %s286 = scalar_lea.vmem [#allocation7], %s285
          %287 = dma.done %s283, 48
        $region52: #{tpu_custom_call.1} parent=47 // pred_fallthru
          _
      $region48: #{tpu_custom_call.1} parent=5 // pred_fallthru
        _
    $region6: #{tpu_custom_call.1} parent=1 // loop_footer
      %s21 = sadd.s32 1, %s17
    $region7: #{tpu_custom_call.1} parent=1 // loop_footer_branch
      %16 = sbr.rel target = $region3
    $region8: #{tpu_custom_call.1} parent=1 // loop_exit
      _
    %288 = vsyncpa [#allocation3], 1
    %s289 = scalar_lea.sflag [#allocation3], 1
    %290 = vsyncpa %s289, 1
    %291 = vsyncpa [#allocation6], 1
    %s292 = scalar_lea.sflag [#allocation6], 1
    %293 = vsyncpa %s292, 1
    %294 = vsyncpa [#allocation4], 1
    %s295 = scalar_lea.sflag [#allocation4], 1
    %296 = vsyncpa %s295, 1

</llo_original>
